<compile_context>
chip_gen: v7x
topology: tpu7x:2x2x1
jax: 0.10.0
libtpu: 0.0.40
codegen_flags: <defaults>
</compile_context>

<pallas_src>
import jax
import jax.numpy as jnp
from jax.experimental import pallas as pl
from jax.experimental.pallas import tpu as pltpu

_LANE = 128
_MIB = 1 << 20


def _round_up(x, m):
    return ((x + m - 1) // m) * m


def _num_tensorcores():
    """Best-effort TensorCore count (v7x: 2, v5e/v6e: 1). Conservative default 1."""
    try:
        d = jax.devices()[0]
        for attr in ("num_cores", "core_count", "num_tensorcores"):
            v = getattr(d, attr, None)
            if v:
                return max(1, int(v))
    except Exception:
        pass
    return 1


def _pick_tiles(n, tm, tk, num_cores):
    """Row tile, reduction tile and padded extents for an (n, n) adjacency."""
    n_pad = _round_up(max(n, 1), _LANE)
    tm = max(_LANE, min(_round_up(tm, _LANE), n_pad))
    tk = max(_LANE, min(_round_up(tk, _LANE), n_pad))
    # Only multi-TC chips (v7x) benefit from splitting the row axis; on
    # single-TC chips (v5e/v6e) halving tm is pure per-step overhead.
    if num_cores > 1:
        while (n_pad + tm - 1) // tm < num_cores and tm > _LANE:
            tm = max(_LANE, _round_up(tm // 2, _LANE))
    n_m = _round_up(n, tm)
    n_k = _round_up(n, tk)
    return tm, tk, n_m, n_k


def _vmem_limit(est_bytes):
    # Default scoped VMEM is only 16 MiB (v5e) / 32 MiB (v6e, v7x); request the
    # actual buffer-set size + headroom, capped at v7x's 64 MiB physical VMEM.
    return int(min(64 * _MIB, max(32 * _MIB, round(est_bytes * 1.3))))


def _cast_pad2(a, rows, cols, dtype):
    if a.dtype != jnp.dtype(dtype):
        a = a.astype(dtype)
    pr, pc = rows - a.shape[0], cols - a.shape[1]
    if pr or pc:
        a = jnp.pad(a, ((0, pr), (0, pc)))
    return a


# --------------------------------------------------------------------------
# Kernel 1: support = x @ W   (W VMEM-resident, f32 MXU acc, bf16 result)
# --------------------------------------------------------------------------
def _support_kernel(x_ref, w_ref, s_ref):
    s_ref[...] = jnp.dot(
        x_ref[...], w_ref[...], preferred_element_type=jnp.float32
    ).astype(s_ref.dtype)


# --------------------------------------------------------------------------
# Kernel 2: out[i] = sum_k adj[i, k] @ support[k]  (+ bias on last k step)
# o_ref is float32 and its block index is invariant along k, so it stays
# VMEM-resident across the reduction and doubles as the accumulator.
# --------------------------------------------------------------------------
def _adj_matmul_kernel(adj_ref, s_ref, bias_ref, o_ref):
    k = pl.program_id(1)

    @pl.when(k == 0)
    def _():
        o_ref[...] = jnp.zeros_like(o_ref)

    o_ref[...] += jnp.dot(adj_ref[...], s_ref[...],
                          preferred_element_type=jnp.float32)

    if bias_ref is not None:
        @pl.when(k == pl.num_programs(1) - 1)
        def _():
            o_ref[...] += bias_ref[...]          # (1, F_out) f32, broadcasts


def _adj_matmul_kernel_nobias(adj_ref, s_ref, o_ref):
    _adj_matmul_kernel(adj_ref, s_ref, None, o_ref)


def prepare_adjacency(adj, *, tm=512, tk=1024, compute_dtype=jnp.bfloat16):
    """Cast + zero-pad the dense adjacency once (reuse across layers/steps).

    Avoids repeating a full read+write XLA pass over the N x N matrix on every
    gcn_forward call (that pass is ~3x the kernel's own adj HBM read).
    """
    n = adj.shape[0]
    _, _, n_m, n_k = _pick_tiles(n, tm, tk, _num_tensorcores())
    return _cast_pad2(adj, n_m, n_k, compute_dtype)


def gcn_forward(x, adj, weight, bias=None, *, tm=512, tk=1024,
                compute_dtype=jnp.bfloat16):
    """output = adj @ (x @ weight) [+ bias], float32 result.

    `adj` may be the raw (N, N) adjacency (any float dtype) or the output of
    `prepare_adjacency` (already compute_dtype and tile-padded).
    """
    N, F_in = x.shape
    assert weight.shape[0] == F_in, "weight/x feature-dim mismatch"
    F_out = weight.shape[1]

    num_cores = _num_tensorcores()
    tm, tk, n_m, n_k = _pick_tiles(N, tm, tk, num_cores)
    f_in_p = _round_up(F_in, _LANE)
    f_out_p = _round_up(F_out, _LANE)
    c_item = jnp.dtype(compute_dtype).itemsize

    if adj.shape == (n_m, n_k) and adj.dtype == jnp.dtype(compute_dtype):
        adj_p = adj                           # already prepared by the caller
    else:
        assert adj.shape == (N, N), (
            f"adj must be ({N},{N}) or prepared ({n_m},{n_k}) {compute_dtype}")
        adj_p = _cast_pad2(adj, n_m, n_k, compute_dtype)

    x_p = _cast_pad2(x, n_k, f_in_p, compute_dtype)
    w_p = _cast_pad2(weight, f_in_p, f_out_p, compute_dtype)

    # ---- Kernel 1: support = x @ W ----------------------------------------
    ts = tk                                   # row tile; divides n_k exactly
    grid_s = (n_k // ts,)
    vmem_s = (2 * ts * f_in_p * c_item        # x stripe (double-buffered)
              + 2 * f_in_p * f_out_p * c_item  # W (pipeline double-buffers it)
              + 2 * ts * f_out_p * c_item)    # support output stripe
    support = pl.pallas_call(
        _support_kernel,
        out_shape=jax.ShapeDtypeStruct((n_k, f_out_p), compute_dtype),
        grid_spec=pltpu.PrefetchScalarGridSpec(
            num_scalar_prefetch=0,
            grid=grid_s,
            in_specs=[
                pl.BlockSpec((ts, f_in_p), lambda i: (i, 0)),
                pl.BlockSpec((f_in_p, f_out_p), lambda i: (0, 0)),  # resident
            ],
            out_specs=pl.BlockSpec((ts, f_out_p), lambda i: (i, 0)),
        ),
        compiler_params=pltpu.CompilerParams(
            dimension_semantics=("parallel",),
            vmem_limit_bytes=_vmem_limit(vmem_s),
        ),
        cost_estimate=pl.CostEstimate(
            flops=int(2 * n_k * f_in_p * f_out_p),
            transcendentals=0,
            bytes_accessed=int(x_p.size * c_item + w_p.size * c_item
                               + n_k * f_out_p * c_item),
        ),
    )(x_p, w_p)

    # ---- Kernel 2: out = adj @ support (+ bias) ----------------------------
    grid = (n_m // tm, n_k // tk)
    vmem_m = (2 * tm * tk * c_item            # adj tile
              + 2 * tk * f_out_p * c_item     # support stripe
              + 2 * tm * f_out_p * 4          # resident f32 output block
              + 2 * f_out_p * 4)              # bias
    in_specs = [
        pl.BlockSpec((tm, tk), lambda i, k: (i, k)),
        pl.BlockSpec((tk, f_out_p), lambda i, k: (k, 0)),
    ]
    operands = [adj_p, support]
    if bias is not None:
        bias_p = _cast_pad2(jnp.asarray(bias).reshape(1, F_out),
                            1, f_out_p, jnp.float32)
        in_specs.append(pl.BlockSpec((1, f_out_p), lambda i, k: (0, 0)))
        operands.append(bias_p)
        kernel = _adj_matmul_kernel
    else:
        kernel = _adj_matmul_kernel_nobias

    out = pl.pallas_call(
        kernel,
        out_shape=jax.ShapeDtypeStruct((n_m, f_out_p), jnp.float32),
        grid_spec=pltpu.PrefetchScalarGridSpec(
            num_scalar_prefetch=0,
            grid=grid,
            in_specs=in_specs,
            out_specs=pl.BlockSpec((tm, f_out_p), lambda i, k: (i, 0)),
        ),
        compiler_params=pltpu.CompilerParams(
            dimension_semantics=("parallel", "arbitrary"),
            vmem_limit_bytes=_vmem_limit(vmem_m),
        ),
        cost_estimate=pl.CostEstimate(
            flops=int(2 * n_m * n_k * f_out_p),
            transcendentals=0,
            bytes_accessed=int(adj_p.size * c_item
                               + grid[0] * n_k * f_out_p * c_item
                               + n_m * f_out_p * 4),
        ),
    )(*operands)

    return out[:N, :F_out]


class GraphConvolution:
    """JAX/Pallas port of the PyTorch GraphConvolution module (forward only)."""

    def __init__(self, in_features, out_features, support=None, bias=False, key=None):
        self.in_features = in_features
        self.out_features = out_features
        self.support = support
        if key is None:
            key = jax.random.PRNGKey(0)
        wkey, bkey = jax.random.split(key)
        init_range = jnp.sqrt(6.0 / (in_features + out_features))
        self.weight = jax.random.uniform(
            wkey, (in_features, out_features), dtype=jnp.float32,
            minval=-init_range, maxval=init_range,
        )
        if bias:
            stdv = 1.0 / jnp.sqrt(out_features)
            self.bias = jax.random.uniform(
                bkey, (out_features,), dtype=jnp.float32, minval=-stdv, maxval=stdv,
            )
        else:
            self.bias = None

    def __call__(self, x, adj):
        # output = adj @ (x @ W) + bias; `adj` may be raw or from prepare_adjacency.
        return gcn_forward(x, adj, self.weight, bias=self.bias)


if __name__ == "__main__":
    key = jax.random.PRNGKey(0)
    kx, kadj, kparam = jax.random.split(key, 3)

    # Deliberately non-128-multiple shapes to exercise the padding path.
    N = 250       # number of graph nodes
    F_IN = 96     # input feature dim
    F_OUT = 48    # output feature dim

    x = jax.random.normal(kx, (N, F_IN), dtype=jnp.float32)
    # symmetric, row-normalized dense adjacency
    a = jax.random.uniform(kadj, (N, N), dtype=jnp.float32)
    adj = (a + a.T) * 0.5
    adj = adj / jnp.sum(adj, axis=1, keepdims=True)

    layer = GraphConvolution(F_IN, F_OUT, support=None, bias=True, key=kparam)

    # Hoisted adjacency preparation (cast + pad once, reuse across calls).
    adj_prepared = prepare_adjacency(adj)
    out = jax.block_until_ready(layer(x, adj_prepared))
    assert out.shape == (N, F_OUT)

    # The raw-adjacency path must give the same result as the prepared path.
    out_raw = jax.block_until_ready(layer(x, adj))
    assert float(jnp.max(jnp.abs(out - out_raw))) < 1e-6

    # Structural check: emulate the kernels' bf16-input / f32-accumulate math.
    bf = jnp.bfloat16
    support_ref = jnp.dot(x.astype(bf), layer.weight.astype(bf),
                          preferred_element_type=jnp.float32).astype(bf)
    ref_struct = jnp.dot(adj.astype(bf), support_ref,
                         preferred_element_type=jnp.float32) + layer.bias
    err_struct = float(jnp.max(jnp.abs(out - ref_struct)))
    assert err_struct < 2e-3, f"structural max abs err {err_struct}"

    # Loose check against the full-f32 reference (bounded bf16 quantization).
    ref_f32 = adj @ (x @ layer.weight) + layer.bias
    err_f32 = float(jnp.max(jnp.abs(out - ref_f32)))
    assert err_f32 < 5e-2, f"f32 max abs err {err_f32}"

    print("KERNEL_OK")
</pallas_src>

<mosaic_0001>
module attributes {stable_mosaic.version = 11 : i64} {
  func.func @_support_kernel(%arg0: i32, %arg1: memref<256x128xbf16, #tpu.memory_space<vmem>>, %arg2: memref<128x128xbf16, #tpu.memory_space<vmem>>, %arg3: memref<256x128xbf16, #tpu.memory_space<vmem>>) attributes {dimension_semantics = [#tpu.dimension_semantics<parallel>], iteration_bounds = array<i64: 1>, scalar_prefetch = 0 : i64, scratch_operands = 0 : i64, tpu.core_type = #tpu.core_type<tc>, window_params = [{transform_indices = @transform_0, window_bounds = array<i64: 256, 128>}, {pipeline_mode = #tpu.pipeline_mode<synchronous>, transform_indices = @transform_1, window_bounds = array<i64: 128, 128>}, {transform_indices = @transform_2, window_bounds = array<i64: 256, 128>}]} {
    %c0 = arith.constant 0 : index
    %c0_0 = arith.constant 0 : index
    %0 = vector.load %arg1[%c0, %c0_0] : memref<256x128xbf16, #tpu.memory_space<vmem>>, vector<256x128xbf16>
    %c0_1 = arith.constant 0 : index
    %c0_2 = arith.constant 0 : index
    %1 = vector.load %arg2[%c0_1, %c0_2] : memref<128x128xbf16, #tpu.memory_space<vmem>>, vector<128x128xbf16>
    %cst = arith.constant dense<0.000000e+00> : vector<256x128xf32>
    %2 = tpu.matmul %0, %1, %cst {dimension_numbers = #tpu.dot_dimension_numbers<[1], [0], [0], [1], [0, 0, 1, 1], [], []>} : vector<256x128xbf16>, vector<128x128xbf16>, vector<256x128xf32> -> vector<256x128xf32>
    %3 = arith.truncf %2 : vector<256x128xf32> to vector<256x128xbf16>
    %c0_3 = arith.constant 0 : index
    %c0_4 = arith.constant 0 : index
    %4 = vector.load %arg3[%c0_3, %c0_4] : memref<256x128xbf16, #tpu.memory_space<vmem>>, vector<256x128xbf16>
    tpu.vector_store %arg3[%c0_3, %c0_4], %3 {strides = array<i32>} : memref<256x128xbf16, #tpu.memory_space<vmem>>, vector<256x128xbf16>,
    return
  }
  func.func @transform_0(%arg0: i32) -> (i32, i32) {
    %c0_i32 = arith.constant 0 : i32
    %c0_i32_0 = arith.constant 0 : i32
    return %arg0, %c0_i32 : i32, i32
  }
  func.func @transform_1(%arg0: i32) -> (i32, i32) {
    %c0_i32 = arith.constant 0 : i32
    %c0_i32_0 = arith.constant 0 : i32
    %c0_i32_1 = arith.constant 0 : i32
    return %c0_i32, %c0_i32_0 : i32, i32
  }
  func.func @transform_2(%arg0: i32) -> (i32, i32) {
    %c0_i32 = arith.constant 0 : i32
    %c0_i32_0 = arith.constant 0 : i32
    return %arg0, %c0_i32 : i32, i32
  }
}

</mosaic_0001>

<llo_original>
// kernel: tpu_custom_call.1
$region0: #{tpu_custom_call.1}
  #allocation0 [shape = 'u32[]', space=smem, size = 0x4, offset = 0x4, fixed_abs, tag = 'smem constant byte address 0x4 - core index']
  #allocation1 [shape = 'u32[144,128]{1,0:T(1,128)}', space=vmem, size = 0x12000, scoped, tag = 'internal scratch']
  %s0 = inlined_call_operand.hbm [shape: bf16[256,128], index: 0, kind: input, shape index: {}]
  %s1 = inlined_call_operand.hbm [shape: bf16[128,128], index: 1, kind: input, shape index: {}]
  %s2 = inlined_call_operand.hbm [shape: bf16[256,128], index: 2, kind: output, shape index: {}]
  %s3 = sld [smem:[#allocation0]]
  $region26: #{tpu_custom_call.1} parent=0
    _
  %s5 = ssub.s32 1, %s3
  %s6 = scalar_select 0, %s5, %s3
  $region1: #{tpu_custom_call.1} parent=0
    #allocation2 [shape = 'u8[65536]{0}', space=vmem, size = 0x10000, scoped, tag = 'input window, operand 0, single buffered']
    #allocation3 [shape = 's32[1]{0}', space=sflag, size = 0x4, scoped, tag = 'scoped memory for tpu_custom_call.1']
    #allocation4 [shape = 's32[1]{0}', space=sflag, size = 0x4, scoped, tag = 'scoped memory for tpu_custom_call.1']
    #allocation5 [shape = 'u8[32768]{0}', space=vmem, size = 0x8000, scoped, tag = 'input window, operand 1, single buffered']
    #allocation6 [shape = 's32[1]{0}', space=sflag, size = 0x4, scoped, tag = 'scoped memory for tpu_custom_call.1']
    #allocation7 [shape = 'u8[65536]{0}', space=vmem, size = 0x10000, scoped, tag = 'output window, operand 0, single buffered']
    %7 = vsyncpa [#allocation3], 0
    %8 = vsyncpa [#allocation6], 0
    %9 = vsyncpa [#allocation4], 0
    // Predicated region
    $region2: #{tpu_custom_call.1} parent=1 // pred_check
      _
    $region3: #{tpu_custom_call.1} parent=1 // pred_check_branch
      %11 = sbr.rel (0) target = $region5
    $region4: #{tpu_custom_call.1} parent=1 // pred_region
      %s13 = ssub.s32 2048, 2048
      %14 = vsyncadd [#allocation3], %s13
      %s15 = sshll.u32 [#allocation2], 4
      %s16 = int_to_ptr.vmem [resolvable:$true] %s15
      %21 = dma.hbm_to_vmem [thread:$0]  %s0, 2048, %s16, [#allocation3], 64, 64, 4
    $region5: #{tpu_custom_call.1} parent=1 // pred_fallthru
      _
    // Predicated region
    $region6: #{tpu_custom_call.1} parent=1 // pred_check
      _
    $region7: #{tpu_custom_call.1} parent=1 // pred_check_branch
      %23 = sbr.rel (0) target = $region9
    $region8: #{tpu_custom_call.1} parent=1 // pred_region
      %s25 = ssub.s32 1024, 1024
      %26 = vsyncadd [#allocation6], %s25
      %s27 = sshll.u32 [#allocation5], 4
      %s28 = int_to_ptr.vmem [resolvable:$true] %s27
      %33 = dma.hbm_to_vmem [thread:$0]  %s1, 1024, %s28, [#allocation6], 64, 64, 4
    $region9: #{tpu_custom_call.1} parent=1 // pred_fallthru
      _
    // Predicated region
    $region10: #{tpu_custom_call.1} parent=1 // pred_check
      _
    $region11: #{tpu_custom_call.1} parent=1 // pred_check_branch
      %35 = sbr.rel (0) target = $region13
    $region12: #{tpu_custom_call.1} parent=1 // pred_region
      %36 = dma.done [#allocation3], 2048
    $region13: #{tpu_custom_call.1} parent=1 // pred_fallthru
      _
    // Predicated region
    $region14: #{tpu_custom_call.1} parent=1 // pred_check
      _
    $region15: #{tpu_custom_call.1} parent=1 // pred_check_branch
      %38 = sbr.rel (0) target = $region17
    $region16: #{tpu_custom_call.1} parent=1 // pred_region
      %39 = dma.done [#allocation6], 1024
    $region17: #{tpu_custom_call.1} parent=1 // pred_fallthru
      _
    %v41 = vld [vmem:[#allocation2] sm:$0xf]
    %v42 = vld [vmem:[#allocation2 + $0x4] sm:$0xf]
    %v43 = vld [vmem:[#allocation2 + $0x8] sm:$0xf]
    %v44 = vld [vmem:[#allocation2 + $0xc] sm:$0xf]
    %v45 = vld [vmem:[#allocation2 + $0x10] sm:$0xf]
    %v46 = vld [vmem:[#allocation2 + $0x14] sm:$0xf]
    %v47 = vld [vmem:[#allocation2 + $0x18] sm:$0xf]
    %v48 = vld [vmem:[#allocation2 + $0x1c] sm:$0xf]
    %v49 = vld [vmem:[#allocation2 + $0x20] sm:$0xf]
    %v50 = vld [vmem:[#allocation2 + $0x24] sm:$0xf]
    %v51 = vld [vmem:[#allocation2 + $0x28] sm:$0xf]
    %v52 = vld [vmem:[#allocation2 + $0x2c] sm:$0xf]
    %v53 = vld [vmem:[#allocation2 + $0x30] sm:$0xf]
    %v54 = vld [vmem:[#allocation2 + $0x34] sm:$0xf]
    %v55 = vld [vmem:[#allocation2 + $0x38] sm:$0xf]
    %v56 = vld [vmem:[#allocation2 + $0x3c] sm:$0xf]
    %v57 = vld [vmem:[#allocation2 + $0x40] sm:$0xf]
    %v58 = vld [vmem:[#allocation2 + $0x44] sm:$0xf]
    %v59 = vld [vmem:[#allocation2 + $0x48] sm:$0xf]
    %v60 = vld [vmem:[#allocation2 + $0x4c] sm:$0xf]
    %v61 = vld [vmem:[#allocation2 + $0x50] sm:$0xf]
    %v62 = vld [vmem:[#allocation2 + $0x54] sm:$0xf]
    %v63 = vld [vmem:[#allocation2 + $0x58] sm:$0xf]
    %v64 = vld [vmem:[#allocation2 + $0x5c] sm:$0xf]
    %v65 = vld [vmem:[#allocation2 + $0x60] sm:$0xf]
    %v66 = vld [vmem:[#allocation2 + $0x64] sm:$0xf]
    %v67 = vld [vmem:[#allocation2 + $0x68] sm:$0xf]
    %v68 = vld [vmem:[#allocation2 + $0x6c] sm:$0xf]
    %v69 = vld [vmem:[#allocation2 + $0x70] sm:$0xf]
    %v70 = vld [vmem:[#allocation2 + $0x74] sm:$0xf]
    %v71 = vld [vmem:[#allocation2 + $0x78] sm:$0xf]
    %v72 = vld [vmem:[#allocation2 + $0x7c] sm:$0xf]
    %v73 = vld [vmem:[#allocation5] sm:$0xf]
    %v74 = vld [vmem:[#allocation5 + $0x4] sm:$0xf]
    %v75 = vld [vmem:[#allocation5 + $0x8] sm:$0xf]
    %v76 = vld [vmem:[#allocation5 + $0xc] sm:$0xf]
    %v77 = vld [vmem:[#allocation5 + $0x10] sm:$0xf]
    %v78 = vld [vmem:[#allocation5 + $0x14] sm:$0xf]
    %v79 = vld [vmem:[#allocation5 + $0x18] sm:$0xf]
    %v80 = vld [vmem:[#allocation5 + $0x1c] sm:$0xf]
    %v81 = vld [vmem:[#allocation5 + $0x20] sm:$0xf]
    %v82 = vld [vmem:[#allocation5 + $0x24] sm:$0xf]
    %v83 = vld [vmem:[#allocation5 + $0x28] sm:$0xf]
    %v84 = vld [vmem:[#allocation5 + $0x2c] sm:$0xf]
    %v85 = vld [vmem:[#allocation5 + $0x30] sm:$0xf]
    %v86 = vld [vmem:[#allocation5 + $0x34] sm:$0xf]
    %v87 = vld [vmem:[#allocation5 + $0x38] sm:$0xf]
    %v88 = vld [vmem:[#allocation5 + $0x3c] sm:$0xf]
    %v121 = vunpack.c.l.b16 %v41
    %v122 = vunpack.c.l.b16 %v42
    %v123 = vunpack.c.l.b16 %v43
    %v124 = vunpack.c.l.b16 %v44
    %v125 = vunpack.c.l.b16 %v45
    %v126 = vunpack.c.l.b16 %v46
    %v127 = vunpack.c.l.b16 %v47
    %v128 = vunpack.c.l.b16 %v48
    %v129 = vunpack.c.l.b16 %v49
    %v130 = vunpack.c.l.b16 %v50
    %v131 = vunpack.c.l.b16 %v51
    %v132 = vunpack.c.l.b16 %v52
    %v133 = vunpack.c.l.b16 %v53
    %v134 = vunpack.c.l.b16 %v54
    %v135 = vunpack.c.l.b16 %v55
    %v136 = vunpack.c.l.b16 %v56
    %v137 = vunpack.c.l.b16 %v57
    %v138 = vunpack.c.l.b16 %v58
    %v139 = vunpack.c.l.b16 %v59
    %v140 = vunpack.c.l.b16 %v60
    %v141 = vunpack.c.l.b16 %v61
    %v142 = vunpack.c.l.b16 %v62
    %v143 = vunpack.c.l.b16 %v63
    %v144 = vunpack.c.l.b16 %v64
    %v145 = vunpack.c.l.b16 %v65
    %v146 = vunpack.c.l.b16 %v66
    %v147 = vunpack.c.l.b16 %v67
    %v148 = vunpack.c.l.b16 %v68
    %v149 = vunpack.c.l.b16 %v69
    %v150 = vunpack.c.l.b16 %v70
    %v151 = vunpack.c.l.b16 %v71
    %v152 = vunpack.c.l.b16 %v72
    %v153 = vpack.c.b16 %v122, %v121
    %v154 = vpack.c.b16 %v124, %v123
    %v155 = vpack.c.b16 %v126, %v125
    %v156 = vpack.c.b16 %v128, %v127
    %v157 = vpack.c.b16 %v130, %v129
    %v158 = vpack.c.b16 %v132, %v131
    %v159 = vpack.c.b16 %v134, %v133
    %v160 = vpack.c.b16 %v136, %v135
    %v161 = vpack.c.b16 %v138, %v137
    %v162 = vpack.c.b16 %v140, %v139
    %v163 = vpack.c.b16 %v142, %v141
    %v164 = vpack.c.b16 %v144, %v143
    %v165 = vpack.c.b16 %v146, %v145
    %v166 = vpack.c.b16 %v148, %v147
    %v167 = vpack.c.b16 %v150, %v149
    %v168 = vpack.c.b16 %v152, %v151
    %v201 = vunpack.c.l.b16 %v73
    %v202 = vunpack.c.l.b16 %v74
    %v203 = vunpack.c.l.b16 %v75
    %v204 = vunpack.c.l.b16 %v76
    %v205 = vunpack.c.l.b16 %v77
    %v206 = vunpack.c.l.b16 %v78
    %v207 = vunpack.c.l.b16 %v79
    %v208 = vunpack.c.l.b16 %v80
    %v209 = vunpack.c.l.b16 %v81
    %v210 = vunpack.c.l.b16 %v82
    %v211 = vunpack.c.l.b16 %v83
    %v212 = vunpack.c.l.b16 %v84
    %v213 = vunpack.c.l.b16 %v85
    %v214 = vunpack.c.l.b16 %v86
    %v215 = vunpack.c.l.b16 %v87
    %v216 = vunpack.c.l.b16 %v88
    %v217 = vpack.c.b16 %v202, %v201
    %v218 = vpack.c.b16 %v204, %v203
    %v219 = vpack.c.b16 %v206, %v205
    %v220 = vpack.c.b16 %v208, %v207
    %v221 = vpack.c.b16 %v210, %v209
    %v222 = vpack.c.b16 %v212, %v211
    %v223 = vpack.c.b16 %v214, %v213
    %v224 = vpack.c.b16 %v216, %v215
    %233 = vmatprep.subr.bf16.mxu0 0
    %234 = vmatpush1.bf16.msra.mxu0 %v217
    %235 = vmatprep.subr.bf16.mxu0 0
    %236 = vmatpush1.bf16.msra.mxu0 %v218
    %237 = vmatprep.subr.bf16.mxu0 0
    %238 = vmatpush1.bf16.msra.mxu0 %v219
    %239 = vmatprep.subr.bf16.mxu0 0
    %240 = vmatpush1.bf16.msra.mxu0 %v220
    %241 = vmatprep.subr.bf16.mxu0 0
    %242 = vmatpush1.bf16.msra.mxu0 %v221
    %243 = vmatprep.subr.bf16.mxu0 0
    %244 = vmatpush1.bf16.msra.mxu0 %v222
    %245 = vmatprep.subr.bf16.mxu0 0
    %246 = vmatpush1.bf16.msra.mxu0 %v223
    %247 = vmatprep.subr.bf16.mxu0 0
    %248 = vmatpush1.bf16.msra.mxu0 %v224
    %249 = vmatprep.subr.bf16.mxu0 0
    %250 = vmatpush1.bf16.msra.mxu0 0
    %251 = vmatprep.subr.bf16.mxu0 0
    %252 = vmatpush1.bf16.msra.mxu0 0
    %253 = vmatprep.subr.bf16.mxu0 0
    %254 = vmatpush1.bf16.msra.mxu0 0
    %255 = vmatprep.subr.bf16.mxu0 0
    %256 = vmatpush1.bf16.msra.mxu0 0
    %257 = vmatprep.subr.bf16.mxu0 0
    %258 = vmatpush1.bf16.msra.mxu0 0
    %259 = vmatprep.subr.bf16.mxu0 0
    %260 = vmatpush1.bf16.msra.mxu0 0
    %261 = vmatprep.subr.bf16.mxu0 0
    %262 = vmatpush1.bf16.msra.mxu0 0
    %263 = vmatprep.subr.bf16.mxu0 0
    %264 = vmatpush1.bf16.msra.mxu0 0
    %265 = vmatprep.mubr.bf16.mxu0 0
    %266 = vmatmul.mubr.bf16.gmra.mrb[0].mxu0 %v153
    %v267 = vpop.f32.mrb[0].mxu0
    %v268 = vadd.f32 0.0, %v267
    %v269 = vpop.f32.mrb[0].mxu0
    %v270 = vpop.f32.mrb[0].mxu0
    %v271 = vadd.f32 0.0, %v270
    %v272 = vpop.f32.mrb[0].mxu0
    %273 = vmatprep.mubr.bf16.mxu0 0
    %274 = vmatmul.mubr.bf16.gmra.mrb[0].mxu0 %v154
    %v275 = vpop.f32.mrb[0].mxu0
    %v276 = vadd.f32 0.0, %v275
    %v277 = vpop.f32.mrb[0].mxu0
    %v278 = vpop.f32.mrb[0].mxu0
    %v279 = vadd.f32 0.0, %v278
    %v280 = vpop.f32.mrb[0].mxu0
    %281 = vmatprep.mubr.bf16.mxu0 0
    %282 = vmatmul.mubr.bf16.gmra.mrb[0].mxu0 %v155
    %v283 = vpop.f32.mrb[0].mxu0
    %v284 = vadd.f32 0.0, %v283
    %v285 = vpop.f32.mrb[0].mxu0
    %v286 = vpop.f32.mrb[0].mxu0
    %v287 = vadd.f32 0.0, %v286
    %v288 = vpop.f32.mrb[0].mxu0
    %289 = vmatprep.mubr.bf16.mxu0 0
    %290 = vmatmul.mubr.bf16.gmra.mrb[0].mxu0 %v156
    %v291 = vpop.f32.mrb[0].mxu0
    %v292 = vadd.f32 0.0, %v291
    %v293 = vpop.f32.mrb[0].mxu0
    %v294 = vpop.f32.mrb[0].mxu0
    %v295 = vadd.f32 0.0, %v294
    %v296 = vpop.f32.mrb[0].mxu0
    %297 = vmatprep.mubr.bf16.mxu0 0
    %298 = vmatmul.mubr.bf16.gmra.mrb[0].mxu0 %v157
    %v299 = vpop.f32.mrb[0].mxu0
    %v300 = vadd.f32 0.0, %v299
    %v301 = vpop.f32.mrb[0].mxu0
    %v302 = vpop.f32.mrb[0].mxu0
    %v303 = vadd.f32 0.0, %v302
    %v304 = vpop.f32.mrb[0].mxu0
    %305 = vmatprep.mubr.bf16.mxu0 0
    %306 = vmatmul.mubr.bf16.gmra.mrb[0].mxu0 %v158
    %v307 = vpop.f32.mrb[0].mxu0
    %v308 = vadd.f32 0.0, %v307
    %v309 = vpop.f32.mrb[0].mxu0
    %v310 = vpop.f32.mrb[0].mxu0
    %v311 = vadd.f32 0.0, %v310
    %v312 = vpop.f32.mrb[0].mxu0
    %313 = vmatprep.mubr.bf16.mxu0 0
    %314 = vmatmul.mubr.bf16.gmra.mrb[0].mxu0 %v159
    %v315 = vpop.f32.mrb[0].mxu0
    %v316 = vadd.f32 0.0, %v315
    %v317 = vpop.f32.mrb[0].mxu0
    %v318 = vpop.f32.mrb[0].mxu0
    %v319 = vadd.f32 0.0, %v318
    %v320 = vpop.f32.mrb[0].mxu0
    %321 = vmatprep.mubr.bf16.mxu0 0
    %322 = vmatmul.mubr.bf16.gmra.mrb[0].mxu0 %v160
    %v323 = vpop.f32.mrb[0].mxu0
    %v324 = vadd.f32 0.0, %v323
    %v325 = vpop.f32.mrb[0].mxu0
    %v326 = vpop.f32.mrb[0].mxu0
    %v327 = vadd.f32 0.0, %v326
    %v328 = vpop.f32.mrb[0].mxu0
    %329 = vmatprep.mubr.bf16.mxu0 0
    %330 = vmatmul.mubr.bf16.gmra.mrb[0].mxu0 %v161
    %v331 = vpop.f32.mrb[0].mxu0
    %v332 = vadd.f32 0.0, %v331
    %v333 = vpop.f32.mrb[0].mxu0
    %v334 = vpop.f32.mrb[0].mxu0
    %v335 = vadd.f32 0.0, %v334
    %v336 = vpop.f32.mrb[0].mxu0
    %337 = vmatprep.mubr.bf16.mxu0 0
    %338 = vmatmul.mubr.bf16.gmra.mrb[0].mxu0 %v162
    %v339 = vpop.f32.mrb[0].mxu0
    %v340 = vadd.f32 0.0, %v339
    %v341 = vpop.f32.mrb[0].mxu0
    %v342 = vpop.f32.mrb[0].mxu0
    %v343 = vadd.f32 0.0, %v342
    %v344 = vpop.f32.mrb[0].mxu0
    %345 = vmatprep.mubr.bf16.mxu0 0
    %346 = vmatmul.mubr.bf16.gmra.mrb[0].mxu0 %v163
    %v347 = vpop.f32.mrb[0].mxu0
    %v348 = vadd.f32 0.0, %v347
    %v349 = vpop.f32.mrb[0].mxu0
    %v350 = vpop.f32.mrb[0].mxu0
    %v351 = vadd.f32 0.0, %v350
    %v352 = vpop.f32.mrb[0].mxu0
    %353 = vmatprep.mubr.bf16.mxu0 0
    %354 = vmatmul.mubr.bf16.gmra.mrb[0].mxu0 %v164
    %v355 = vpop.f32.mrb[0].mxu0
    %v356 = vadd.f32 0.0, %v355
    %v357 = vpop.f32.mrb[0].mxu0
    %v358 = vpop.f32.mrb[0].mxu0
    %v359 = vadd.f32 0.0, %v358
    %v360 = vpop.f32.mrb[0].mxu0
    %361 = vmatprep.mubr.bf16.mxu0 0
    %362 = vmatmul.mubr.bf16.gmra.mrb[0].mxu0 %v165
    %v363 = vpop.f32.mrb[0].mxu0
    %v364 = vadd.f32 0.0, %v363
    %v365 = vpop.f32.mrb[0].mxu0
    %v366 = vpop.f32.mrb[0].mxu0
    %v367 = vadd.f32 0.0, %v366
    %v368 = vpop.f32.mrb[0].mxu0
    %369 = vmatprep.mubr.bf16.mxu0 0
    %370 = vmatmul.mubr.bf16.gmra.mrb[0].mxu0 %v166
    %v371 = vpop.f32.mrb[0].mxu0
    %v372 = vadd.f32 0.0, %v371
    %v373 = vpop.f32.mrb[0].mxu0
    %v374 = vpop.f32.mrb[0].mxu0
    %v375 = vadd.f32 0.0, %v374
    %v376 = vpop.f32.mrb[0].mxu0
    %377 = vmatprep.mubr.bf16.mxu0 0
    %378 = vmatmul.mubr.bf16.gmra.mrb[0].mxu0 %v167
    %v379 = vpop.f32.mrb[0].mxu0
    %v380 = vadd.f32 0.0, %v379
    %v381 = vpop.f32.mrb[0].mxu0
    %v382 = vpop.f32.mrb[0].mxu0
    %v383 = vadd.f32 0.0, %v382
    %v384 = vpop.f32.mrb[0].mxu0
    %385 = vmatprep.mubr.bf16.mxu0 0
    %386 = vmatmul.mubr.bf16.gmra.mrb[0].mxu0 %v168
    %v387 = vpop.f32.mrb[0].mxu0
    %v388 = vadd.f32 0.0, %v387
    %v389 = vpop.f32.mrb[0].mxu0
    %v390 = vpop.f32.mrb[0].mxu0
    %v391 = vadd.f32 0.0, %v390
    %v392 = vpop.f32.mrb[0].mxu0
    %393 = vdwg.mxu0
    %v394 = vpack.c.bf16 %v271, %v268
    %v395 = vpack.c.bf16 %v279, %v276
    %v396 = vpack.c.bf16 %v287, %v284
    %v397 = vpack.c.bf16 %v295, %v292
    %v398 = vpack.c.bf16 %v303, %v300
    %v399 = vpack.c.bf16 %v311, %v308
    %v400 = vpack.c.bf16 %v319, %v316
    %v401 = vpack.c.bf16 %v327, %v324
    %v402 = vpack.c.bf16 %v335, %v332
    %v403 = vpack.c.bf16 %v343, %v340
    %v404 = vpack.c.bf16 %v351, %v348
    %v405 = vpack.c.bf16 %v359, %v356
    %v406 = vpack.c.bf16 %v367, %v364
    %v407 = vpack.c.bf16 %v375, %v372
    %v408 = vpack.c.bf16 %v383, %v380
    %v409 = vpack.c.bf16 %v391, %v388
    %v426 = vunpack.c.l.b16 %v394
    %v427 = vunpack.c.h.b16 %v394
    %v428 = vunpack.c.l.b16 %v395
    %v429 = vunpack.c.h.b16 %v395
    %v430 = vunpack.c.l.b16 %v396
    %v431 = vunpack.c.h.b16 %v396
    %v432 = vunpack.c.l.b16 %v397
    %v433 = vunpack.c.h.b16 %v397
    %v434 = vunpack.c.l.b16 %v398
    %v435 = vunpack.c.h.b16 %v398
    %v436 = vunpack.c.l.b16 %v399
    %v437 = vunpack.c.h.b16 %v399
    %v438 = vunpack.c.l.b16 %v400
    %v439 = vunpack.c.h.b16 %v400
    %v440 = vunpack.c.l.b16 %v401
    %v441 = vunpack.c.h.b16 %v401
    %v442 = vunpack.c.l.b16 %v402
    %v443 = vunpack.c.h.b16 %v402
    %v444 = vunpack.c.l.b16 %v403
    %v445 = vunpack.c.h.b16 %v403
    %v446 = vunpack.c.l.b16 %v404
    %v447 = vunpack.c.h.b16 %v404
    %v448 = vunpack.c.l.b16 %v405
    %v449 = vunpack.c.h.b16 %v405
    %v450 = vunpack.c.l.b16 %v406
    %v451 = vunpack.c.h.b16 %v406
    %v452 = vunpack.c.l.b16 %v407
    %v453 = vunpack.c.h.b16 %v407
    %v454 = vunpack.c.l.b16 %v408
    %v455 = vunpack.c.h.b16 %v408
    %v456 = vunpack.c.l.b16 %v409
    %v457 = vunpack.c.h.b16 %v409
    %v458 = vpack.c.b16 %v426, %v426
    %v459 = vpack.c.b16 %v427, %v427
    %v460 = vpack.c.b16 %v428, %v428
    %v461 = vpack.c.b16 %v429, %v429
    %v462 = vpack.c.b16 %v430, %v430
    %v463 = vpack.c.b16 %v431, %v431
    %v464 = vpack.c.b16 %v432, %v432
    %v465 = vpack.c.b16 %v433, %v433
    %v466 = vpack.c.b16 %v434, %v434
    %v467 = vpack.c.b16 %v435, %v435
    %v468 = vpack.c.b16 %v436, %v436
    %v469 = vpack.c.b16 %v437, %v437
    %v470 = vpack.c.b16 %v438, %v438
    %v471 = vpack.c.b16 %v439, %v439
    %v472 = vpack.c.b16 %v440, %v440
    %v473 = vpack.c.b16 %v441, %v441
    %v474 = vpack.c.b16 %v442, %v442
    %v475 = vpack.c.b16 %v443, %v443
    %v476 = vpack.c.b16 %v444, %v444
    %v477 = vpack.c.b16 %v445, %v445
    %v478 = vpack.c.b16 %v446, %v446
    %v479 = vpack.c.b16 %v447, %v447
    %v480 = vpack.c.b16 %v448, %v448
    %v481 = vpack.c.b16 %v449, %v449
    %v482 = vpack.c.b16 %v450, %v450
    %v483 = vpack.c.b16 %v451, %v451
    %v484 = vpack.c.b16 %v452, %v452
    %v485 = vpack.c.b16 %v453, %v453
    %v486 = vpack.c.b16 %v454, %v454
    %v487 = vpack.c.b16 %v455, %v455
    %v488 = vpack.c.b16 %v456, %v456
    %v489 = vpack.c.b16 %v457, %v457
    %522 = vst [vmem:[#allocation7] sm:$0xf] %v458
    %523 = vst [vmem:[#allocation7 + $0x4] sm:$0xf] %v459
    %524 = vst [vmem:[#allocation7 + $0x8] sm:$0xf] %v460
    %525 = vst [vmem:[#allocation7 + $0xc] sm:$0xf] %v461
    %526 = vst [vmem:[#allocation7 + $0x10] sm:$0xf] %v462
    %527 = vst [vmem:[#allocation7 + $0x14] sm:$0xf] %v463
    %528 = vst [vmem:[#allocation7 + $0x18] sm:$0xf] %v464
    %529 = vst [vmem:[#allocation7 + $0x1c] sm:$0xf] %v465
    %530 = vst [vmem:[#allocation7 + $0x20] sm:$0xf] %v466
    %531 = vst [vmem:[#allocation7 + $0x24] sm:$0xf] %v467
    %532 = vst [vmem:[#allocation7 + $0x28] sm:$0xf] %v468
    %533 = vst [vmem:[#allocation7 + $0x2c] sm:$0xf] %v469
    %534 = vst [vmem:[#allocation7 + $0x30] sm:$0xf] %v470
    %535 = vst [vmem:[#allocation7 + $0x34] sm:$0xf] %v471
    %536 = vst [vmem:[#allocation7 + $0x38] sm:$0xf] %v472
    %537 = vst [vmem:[#allocation7 + $0x3c] sm:$0xf] %v473
    %538 = vst [vmem:[#allocation7 + $0x40] sm:$0xf] %v474
    %539 = vst [vmem:[#allocation7 + $0x44] sm:$0xf] %v475
    %540 = vst [vmem:[#allocation7 + $0x48] sm:$0xf] %v476
    %541 = vst [vmem:[#allocation7 + $0x4c] sm:$0xf] %v477
    %542 = vst [vmem:[#allocation7 + $0x50] sm:$0xf] %v478
    %543 = vst [vmem:[#allocation7 + $0x54] sm:$0xf] %v479
    %544 = vst [vmem:[#allocation7 + $0x58] sm:$0xf] %v480
    %545 = vst [vmem:[#allocation7 + $0x5c] sm:$0xf] %v481
    %546 = vst [vmem:[#allocation7 + $0x60] sm:$0xf] %v482
    %547 = vst [vmem:[#allocation7 + $0x64] sm:$0xf] %v483
    %548 = vst [vmem:[#allocation7 + $0x68] sm:$0xf] %v484
    %549 = vst [vmem:[#allocation7 + $0x6c] sm:$0xf] %v485
    %550 = vst [vmem:[#allocation7 + $0x70] sm:$0xf] %v486
    %551 = vst [vmem:[#allocation7 + $0x74] sm:$0xf] %v487
    %552 = vst [vmem:[#allocation7 + $0x78] sm:$0xf] %v488
    %553 = vst [vmem:[#allocation7 + $0x7c] sm:$0xf] %v489
    // Predicated region
    $region18: #{tpu_custom_call.1} parent=1 // pred_check
      _
    $region19: #{tpu_custom_call.1} parent=1 // pred_check_branch
      %555 = sbr.rel (0) target = $region21
    $region20: #{tpu_custom_call.1} parent=1 // pred_region
      %s557 = ssub.s32 2048, 2048
      %558 = vsyncadd [#allocation4], %s557
      %s559 = sshll.u32 [#allocation7], 4
      %s560 = int_to_ptr.vmem [resolvable:$true] %s559
      %565 = dma.vmem_to_hbm [thread:$0]  %s560, 2048, %s2, [#allocation4], 64, 64, 4
    $region21: #{tpu_custom_call.1} parent=1 // pred_fallthru
      _
    // Predicated region
    $region22: #{tpu_custom_call.1} parent=1 // pred_check
      _
    $region23: #{tpu_custom_call.1} parent=1 // pred_check_branch
      %567 = sbr.rel (0) target = $region25
    $region24: #{tpu_custom_call.1} parent=1 // pred_region
      %568 = dma.done [#allocation4], 2048
    $region25: #{tpu_custom_call.1} parent=1 // pred_fallthru
      _
    %569 = vsyncpa [#allocation3], 1
    %570 = vsyncpa [#allocation6], 1
    %571 = vsyncpa [#allocation4], 1

</llo_original>
